<compile_context>
chip_gen: v5e
topology: v5e:2x2
jax: 0.10.0
libtpu: 0.0.40
codegen_flags: <defaults>
</compile_context>

<pallas_src>
import math
from functools import partial

import jax
import jax.numpy as jnp
from jax.experimental import pallas as pl
from jax.experimental.pallas import tpu as pltpu


def _attention_kernel(q_ref, k_ref, v_ref,
                      wq_ref, bq_ref, wk_ref, bk_ref, wv_ref, bv_ref,
                      *out_and_scratch,
                      s_valid, inv_scale, return_attention):
    if return_attention:
        ctx_ref, attn_ref, kT_ref, vproj_ref = out_and_scratch
    else:
        ctx_ref, kT_ref, vproj_ref = out_and_scratch
        attn_ref = None

    Bt, Tq, H = q_ref.shape
    Sk = k_ref.shape[1]
    A = wq_ref.shape[1]

    # K / V projections once per batch tile.  The q axis is 'arbitrary' and
    # iterates from 0 on the same core for each batch tile, so the scratch is
    # valid for every later q step.  K is stored transposed so the score
    # contraction is an NN matmul with no per-q-tile XLU transpose.
    @pl.when(pl.program_id(1) == 0)
    def _():
        k2 = k_ref[...].reshape(Bt * Sk, H)
        v2 = v_ref[...].reshape(Bt * Sk, H)
        kproj = (jnp.dot(k2, wk_ref[...], preferred_element_type=jnp.float32)
                 + bk_ref[...]).reshape(Bt, Sk, A)
        kT_ref[...] = jnp.transpose(kproj, (0, 2, 1))        # (Bt, A, Sk), once
        vproj_ref[...] = (jnp.dot(v2, wv_ref[...],
                                  preferred_element_type=jnp.float32)
                          + bv_ref[...]).reshape(Bt, Sk, H)

    # Q projection for this (batch-tile, query-tile); 1/sqrt(A) folded into Q.
    q = jnp.nan_to_num(q_ref[...], nan=0.0, posinf=1.0, neginf=-1.0)
    Q = (jnp.dot(q.reshape(Bt * Tq, H), wq_ref[...],
                 preferred_element_type=jnp.float32) + bq_ref[...])
    Q = (Q * inv_scale).reshape(Bt, Tq, A)

    # Scores: batched NN matmul, contraction over A (sublane dim of K^T).
    scores = jax.lax.dot_general(
        Q, kT_ref[...],
        dimension_numbers=(((2,), (1,)), ((0,), (0,))),
        preferred_element_type=jnp.float32)                  # (Bt, Tq, Sk)
    # TODO(synk): torch applies nan_to_num to scores only when they already
    # contain NaN/Inf; that branch is dropped here (identity for finite inputs).

    if Sk > s_valid:  # mask the lane-padding key columns added by the wrapper
        col = jax.lax.broadcasted_iota(jnp.int32, (1, 1, Sk), 2)
        scores = jnp.where(col < s_valid, scores, -jnp.inf)

    # Numerically stable softmax; reciprocal on the EUP + one Newton step.
    m = jnp.max(scores, axis=-1, keepdims=True)
    e = jnp.exp(scores - m)
    denom = jnp.sum(e, axis=-1, keepdims=True)
    r = pl.reciprocal(denom, approx=True)
    r = r * (2.0 - denom * r)
    attn = e * r

    # Context: (Bt, Tq, H); padded key rows carry exactly-zero attention.
    ctx = jax.lax.dot_general(
        attn, vproj_ref[...],
        dimension_numbers=(((2,), (1,)), ((0,), (0,))),
        preferred_element_type=jnp.float32)

    ctx_ref[...] = ctx.astype(ctx_ref.dtype)
    if return_attention:
        attn_ref[...] = attn.astype(attn_ref.dtype)


_VMEM_BUDGET_BYTES = 48 * 1024 * 1024   # leave headroom on v7x's 64 MiB VMEM


def _round_up(x, m):
    return ((x + m - 1) // m) * m


def _q_tile_candidates(sq):
    cands = []
    if sq <= 256:
        cands.append(sq)                       # sq is a multiple of 8
    for t in (256, 128, 64, 32, 16, 8):
        if t < sq and sq % t == 0 and t not in cands:
            cands.append(t)
    return cands


def _batch_tile_candidates(B):
    if B <= 1:
        return [1]
    # prefer >= 2 batch grid tiles so both v7x TensorCores get work
    start = max(1, B // 2)
    return [d for d in range(start, 0, -1) if B % d == 0]


def _vmem_estimate(Bt, Tq, Sk, H, A, return_attention):
    f32 = 4
    dbl, sgl = 2, 1     # Buffered(2) q/output blocks vs Buffered(1) K/V/weights
    io = (dbl * Bt * Tq * H                       # query block
          + sgl * 2 * Bt * Sk * H                 # key + value blocks
          + sgl * (2 * (H * A + A) + H * H + H)   # weights + biases
          + dbl * Bt * Tq * H)                    # ctx output
    if return_attention:
        io += dbl * Bt * Tq * Sk                  # attn output
    scratch = Bt * Sk * (A + H)                   # K^T + V projection scratch
    live = Bt * Tq * (3 * Sk + 2 * A + 2 * H)     # scores/exp/attn + Q + ctx temps
    return f32 * (io + scratch + live)


def _fit_tiles(B, Sq, Sk, H, A, return_attention):
    bt_cands = _batch_tile_candidates(B)
    tq_cands = _q_tile_candidates(Sq)
    Bt, Tq = bt_cands[0], tq_cands[0]
    for bt in bt_cands:                    # shrink the batch tile first...
        Bt = bt
        if _vmem_estimate(Bt, Tq, Sk, H, A, return_attention) <= _VMEM_BUDGET_BYTES:
            break
    for tq in tq_cands:                    # ...then the query tile
        Tq = tq
        if _vmem_estimate(Bt, Tq, Sk, H, A, return_attention) <= _VMEM_BUDGET_BYTES:
            break
    # TODO(synk): for extremely large S the K/V projection scratch itself can
    # exceed the budget; chunking that projection along S is not implemented.
    return Bt, Tq


def attention_layer(query, key, value, params, return_attention=True):
    """Pallas implementation of AttentionLayer.forward (mask=None).

    query/key/value: (B, S, H) float32.
    params: dict with 'wq','bq','wk','bk','wv','bv' (weights stored (in, out)).
    Returns (context (B, S, H), attention_weights (B, S, S)), or just context
    when return_attention=False.
    """
    # TODO(synk): the optional `mask` argument (masked_fill with -1e9) of the
    # torch module is not wired in; the default mask=None path is implemented.
    B, S, H = query.shape
    A = params["wq"].shape[1]
    inv_scale = 1.0 / math.sqrt(float(A))

    Sq = _round_up(S, 8)      # query rows: sublane multiple
    Sk = _round_up(S, 128)    # key cols: lane multiple -> lane-dense attn store
    if Sq != S:
        query = jnp.pad(query, ((0, 0), (0, Sq - S), (0, 0)))
    if Sk != S:
        key = jnp.pad(key, ((0, 0), (0, Sk - S), (0, 0)))
        value = jnp.pad(value, ((0, 0), (0, Sk - S), (0, 0)))

    Bt, Tq = _fit_tiles(B, Sq, Sk, H, A, return_attention)
    grid = (B // Bt, Sq // Tq)

    # Lane-aligned 2-D biases (avoid 1-D sublane padding).
    bq2 = params["bq"].reshape(1, A)
    bk2 = params["bk"].reshape(1, A)
    bv2 = params["bv"].reshape(1, H)

    single = pl.Buffered(1)   # blocks that never change across the q axis
    q_spec = pl.BlockSpec((Bt, Tq, H), lambda bi, qi: (bi, qi, 0))
    kv_spec = pl.BlockSpec((Bt, Sk, H), lambda bi, qi: (bi, 0, 0),
                           pipeline_mode=single)

    def w_spec(shape):
        return pl.BlockSpec(shape, lambda bi, qi: (0,) * len(shape),
                            pipeline_mode=single)

    ctx_spec = pl.BlockSpec((Bt, Tq, H), lambda bi, qi: (bi, qi, 0))
    attn_spec = pl.BlockSpec((Bt, Tq, Sk), lambda bi, qi: (bi, qi, 0))

    out_shape = [jax.ShapeDtypeStruct((B, Sq, H), jnp.float32)]
    out_specs = [ctx_spec]
    if return_attention:
        out_shape.append(jax.ShapeDtypeStruct((B, Sq, Sk), jnp.float32))
        out_specs.append(attn_spec)

    est = _vmem_estimate(Bt, Tq, Sk, H, A, return_attention)
    vmem_limit = int(min(max(2 * est, 32 * 1024 * 1024), _VMEM_BUDGET_BYTES))

    kernel = partial(_attention_kernel, s_valid=S, inv_scale=inv_scale,
                     return_attention=return_attention)

    outs = pl.pallas_call(
        kernel,
        out_shape=tuple(out_shape),
        grid_spec=pltpu.PrefetchScalarGridSpec(
            num_scalar_prefetch=0,
            grid=grid,
            in_specs=[
                q_spec, kv_spec, kv_spec,            # query, key, value
                w_spec((H, A)), w_spec((1, A)),      # W_q, b_q
                w_spec((H, A)), w_spec((1, A)),      # W_k, b_k
                w_spec((H, H)), w_spec((1, H)),      # W_v, b_v
            ],
            out_specs=out_specs,
            scratch_shapes=[
                pltpu.VMEM((Bt, A, Sk), jnp.float32),   # K projection, transposed
                pltpu.VMEM((Bt, Sk, H), jnp.float32),   # V projection
            ],
        ),
        compiler_params=pltpu.CompilerParams(
            dimension_semantics=("parallel", "arbitrary"),
            vmem_limit_bytes=vmem_limit,
        ),
    )(query, key, value,
      params["wq"], bq2, params["wk"], bk2, params["wv"], bv2)

    ctx = outs[0][:, :S, :]
    if return_attention:
        return ctx, outs[1][:, :S, :S]
    return ctx


def init_params(key, hidden_size, attention_size=None):
    """Deterministic xavier-uniform weights, zero biases (matches __init__)."""
    if attention_size is None:
        attention_size = hidden_size
    kq, kk, kv = jax.random.split(key, 3)

    def xavier(k, fan_in, fan_out):
        limit = math.sqrt(6.0 / (fan_in + fan_out))
        # stored as (in, out) so the kernel computes x @ W + b
        return jax.random.uniform(k, (fan_in, fan_out), jnp.float32,
                                  minval=-limit, maxval=limit)

    return {
        "wq": xavier(kq, hidden_size, attention_size),
        "bq": jnp.zeros((attention_size,), jnp.float32),
        "wk": xavier(kk, hidden_size, attention_size),
        "bk": jnp.zeros((attention_size,), jnp.float32),
        "wv": xavier(kv, hidden_size, hidden_size),
        "bv": jnp.zeros((hidden_size,), jnp.float32),
    }


def _reference(query, key, value, params, attention_size):
    """Pure-JAX reference of the torch forward (mask=None)."""
    q = jnp.nan_to_num(query, nan=0.0, posinf=1.0, neginf=-1.0)
    Q = q @ params["wq"] + params["bq"]
    K = key @ params["wk"] + params["bk"]
    V = value @ params["wv"] + params["bv"]
    scores = jnp.einsum("bqa,bka->bqk", Q, K) / math.sqrt(float(attention_size))
    attn = jax.nn.softmax(scores, axis=-1)
    ctx = jnp.einsum("bqk,bkh->bqh", attn, V)
    return ctx, attn


def _run_case(seed, B, S, H, A=None):
    root = jax.random.PRNGKey(seed)
    k_params, k_q, k_k, k_v = jax.random.split(root, 4)
    params = init_params(k_params, H, A)
    query = jax.random.normal(k_q, (B, S, H), jnp.float32)
    key = jax.random.normal(k_k, (B, S, H), jnp.float32)
    value = jax.random.normal(k_v, (B, S, H), jnp.float32)

    ctx, attn = attention_layer(query, key, value, params)
    jax.block_until_ready((ctx, attn))

    a = H if A is None else A
    ref_ctx, ref_attn = _reference(query, key, value, params, a)
    assert ctx.shape == (B, S, H) and attn.shape == (B, S, S)
    assert jnp.allclose(ctx, ref_ctx, atol=1e-4, rtol=1e-4), "context mismatch"
    assert jnp.allclose(attn, ref_attn, atol=1e-4, rtol=1e-4), "attn mismatch"

    # context-only entry point (skips the (B, S, S) HBM write entirely)
    ctx_only = attention_layer(query, key, value, params, return_attention=False)
    jax.block_until_ready(ctx_only)
    assert jnp.allclose(ctx_only, ref_ctx, atol=1e-4, rtol=1e-4), "ctx-only mismatch"


if __name__ == "__main__":
    # Main case from the module spec (batch=2, seq=8, hidden=32).
    _run_case(0, B=2, S=8, H=32)
    # Extra case: attention_size != hidden_size, >1 batch element per tile.
    _run_case(0, B=4, S=16, H=32, A=64)
    print("KERNEL_OK")
</pallas_src>

<mosaic_0001>
module attributes {stable_mosaic.version = 11 : i64} {
  func.func @_attention_kernel(%arg0: i32, %arg1: i32, %arg2: memref<1x8x32xf32, #tpu.memory_space<vmem>>, %arg3: memref<1x128x32xf32, #tpu.memory_space<vmem>>, %arg4: memref<1x128x32xf32, #tpu.memory_space<vmem>>, %arg5: memref<32x32xf32, #tpu.memory_space<vmem>>, %arg6: memref<1x32xf32, #tpu.memory_space<vmem>>, %arg7: memref<32x32xf32, #tpu.memory_space<vmem>>, %arg8: memref<1x32xf32, #tpu.memory_space<vmem>>, %arg9: memref<32x32xf32, #tpu.memory_space<vmem>>, %arg10: memref<1x32xf32, #tpu.memory_space<vmem>>, %arg11: memref<1x8x32xf32, #tpu.memory_space<vmem>>, %arg12: memref<1x8x128xf32, #tpu.memory_space<vmem>>, %arg13: memref<1x32x128xf32, #tpu.memory_space<vmem>>, %arg14: memref<1x128x32xf32, #tpu.memory_space<vmem>>) attributes {dimension_semantics = [#tpu.dimension_semantics<parallel>, #tpu.dimension_semantics<arbitrary>], iteration_bounds = array<i64: 2, 1>, scalar_prefetch = 0 : i64, scratch_operands = 2 : i64, tpu.core_type = #tpu.core_type<tc>, window_params = [{transform_indices = @transform_0, window_bounds = array<i64: 1, 8, 32>}, {pipeline_mode = #tpu.pipeline_mode<synchronous>, transform_indices = @transform_1, window_bounds = array<i64: 1, 128, 32>}, {pipeline_mode = #tpu.pipeline_mode<synchronous>, transform_indices = @transform_2, window_bounds = array<i64: 1, 128, 32>}, {pipeline_mode = #tpu.pipeline_mode<synchronous>, transform_indices = @transform_3, window_bounds = array<i64: 32, 32>}, {pipeline_mode = #tpu.pipeline_mode<synchronous>, transform_indices = @transform_4, window_bounds = array<i64: 1, 32>}, {pipeline_mode = #tpu.pipeline_mode<synchronous>, transform_indices = @transform_5, window_bounds = array<i64: 32, 32>}, {pipeline_mode = #tpu.pipeline_mode<synchronous>, transform_indices = @transform_6, window_bounds = array<i64: 1, 32>}, {pipeline_mode = #tpu.pipeline_mode<synchronous>, transform_indices = @transform_7, window_bounds = array<i64: 32, 32>}, {pipeline_mode = #tpu.pipeline_mode<synchronous>, transform_indices = @transform_8, window_bounds = array<i64: 1, 32>}, {transform_indices = @transform_9, window_bounds = array<i64: 1, 8, 32>}, {transform_indices = @transform_10, window_bounds = array<i64: 1, 8, 128>}]} {
    %c0_i32 = arith.constant 0 : i32
    %0 = arith.cmpi eq, %arg1, %c0_i32 : i32
    %1 = arith.extui %0 : i1 to i32
    %c0_i32_0 = arith.constant 0 : i32
    %2 = arith.cmpi ne, %1, %c0_i32_0 : i32
    scf.if %2 {
      %c0_31 = arith.constant 0 : index
      %c0_32 = arith.constant 0 : index
      %c0_33 = arith.constant 0 : index
      %51 = vector.load %arg3[%c0_31, %c0_32, %c0_33] : memref<1x128x32xf32, #tpu.memory_space<vmem>>, vector<1x128x32xf32>
      %52 = vector.shape_cast %51 : vector<1x128x32xf32> to vector<128x32xf32>
      %c0_34 = arith.constant 0 : index
      %c0_35 = arith.constant 0 : index
      %c0_36 = arith.constant 0 : index
      %53 = vector.load %arg4[%c0_34, %c0_35, %c0_36] : memref<1x128x32xf32, #tpu.memory_space<vmem>>, vector<1x128x32xf32>
      %54 = vector.shape_cast %53 : vector<1x128x32xf32> to vector<128x32xf32>
      %c0_37 = arith.constant 0 : index
      %c0_38 = arith.constant 0 : index
      %55 = vector.load %arg7[%c0_37, %c0_38] : memref<32x32xf32, #tpu.memory_space<vmem>>, vector<32x32xf32>
      %cst_39 = arith.constant dense<0.000000e+00> : vector<128x32xf32>
      %56 = tpu.matmul %52, %55, %cst_39 {dimension_numbers = #tpu.dot_dimension_numbers<[1], [0], [0], [1], [0, 0, 1, 1], [], []>} : vector<128x32xf32>, vector<32x32xf32>, vector<128x32xf32> -> vector<128x32xf32>
      %c0_40 = arith.constant 0 : index
      %c0_41 = arith.constant 0 : index
      %57 = vector.load %arg8[%c0_40, %c0_41] : memref<1x32xf32, #tpu.memory_space<vmem>>, vector<1x32xf32>
      %58 = vector.broadcast %57 : vector<1x32xf32> to vector<128x32xf32>
      %59 = arith.addf %56, %58 : vector<128x32xf32>
      %60 = vector.shape_cast %59 : vector<128x32xf32> to vector<1x128x32xf32>
      %61 = tpu.transpose %60, [0, 2, 1] : vector<1x128x32xf32> -> vector<1x32x128xf32>
      %c0_42 = arith.constant 0 : index
      %c0_43 = arith.constant 0 : index
      %c0_44 = arith.constant 0 : index
      %62 = vector.load %arg13[%c0_42, %c0_43, %c0_44] : memref<1x32x128xf32, #tpu.memory_space<vmem>>, vector<1x32x128xf32>
      tpu.vector_store %arg13[%c0_42, %c0_43, %c0_44], %61 {strides = array<i32>} : memref<1x32x128xf32, #tpu.memory_space<vmem>>, vector<1x32x128xf32>,
      %c0_45 = arith.constant 0 : index
      %c0_46 = arith.constant 0 : index
      %63 = vector.load %arg9[%c0_45, %c0_46] : memref<32x32xf32, #tpu.memory_space<vmem>>, vector<32x32xf32>
      %cst_47 = arith.constant dense<0.000000e+00> : vector<128x32xf32>
      %64 = tpu.matmul %54, %63, %cst_47 {dimension_numbers = #tpu.dot_dimension_numbers<[1], [0], [0], [1], [0, 0, 1, 1], [], []>} : vector<128x32xf32>, vector<32x32xf32>, vector<128x32xf32> -> vector<128x32xf32>
      %c0_48 = arith.constant 0 : index
      %c0_49 = arith.constant 0 : index
      %65 = vector.load %arg10[%c0_48, %c0_49] : memref<1x32xf32, #tpu.memory_space<vmem>>, vector<1x32xf32>
      %66 = vector.broadcast %65 : vector<1x32xf32> to vector<128x32xf32>
      %67 = arith.addf %64, %66 : vector<128x32xf32>
      %68 = vector.shape_cast %67 : vector<128x32xf32> to vector<1x128x32xf32>
      %c0_50 = arith.constant 0 : index
      %c0_51 = arith.constant 0 : index
      %c0_52 = arith.constant 0 : index
      %69 = vector.load %arg14[%c0_50, %c0_51, %c0_52] : memref<1x128x32xf32, #tpu.memory_space<vmem>>, vector<1x128x32xf32>
      tpu.vector_store %arg14[%c0_50, %c0_51, %c0_52], %68 {strides = array<i32>} : memref<1x128x32xf32, #tpu.memory_space<vmem>>, vector<1x128x32xf32>,
    } else {
    }
    %c0 = arith.constant 0 : index
    %c0_1 = arith.constant 0 : index
    %c0_2 = arith.constant 0 : index
    %3 = vector.load %arg2[%c0, %c0_1, %c0_2] : memref<1x8x32xf32, #tpu.memory_space<vmem>>, vector<1x8x32xf32>
    %cst = arith.constant 0.000000e+00 : f32
    %cst_3 = arith.constant -1.000000e+00 : f32
    %cst_4 = arith.constant 1.000000e+00 : f32
    %4 = arith.cmpf one, %3, %3 : vector<1x8x32xf32>
    %5 = vector.broadcast %cst : f32 to vector<1x8x32xf32>
    %6 = arith.select %4, %5, %3 : vector<1x8x32xi1>, vector<1x8x32xf32>
    %cst_5 = arith.constant 0x7F800000 : f32
    %7 = vector.broadcast %cst_5 : f32 to vector<1x8x32xf32>
    %8 = arith.cmpf oeq, %6, %7 : vector<1x8x32xf32>
    %9 = vector.broadcast %cst_4 : f32 to vector<1x8x32xf32>
    %10 = arith.select %8, %9, %6 : vector<1x8x32xi1>, vector<1x8x32xf32>
    %cst_6 = arith.constant 0xFF800000 : f32
    %11 = vector.broadcast %cst_6 : f32 to vector<1x8x32xf32>
    %12 = arith.cmpf oeq, %10, %11 : vector<1x8x32xf32>
    %13 = vector.broadcast %cst_3 : f32 to vector<1x8x32xf32>
    %14 = arith.select %12, %13, %10 : vector<1x8x32xi1>, vector<1x8x32xf32>
    %15 = vector.shape_cast %14 : vector<1x8x32xf32> to vector<8x32xf32>
    %c0_7 = arith.constant 0 : index
    %c0_8 = arith.constant 0 : index
    %16 = vector.load %arg5[%c0_7, %c0_8] : memref<32x32xf32, #tpu.memory_space<vmem>>, vector<32x32xf32>
    %cst_9 = arith.constant dense<0.000000e+00> : vector<8x32xf32>
    %17 = tpu.matmul %15, %16, %cst_9 {dimension_numbers = #tpu.dot_dimension_numbers<[1], [0], [0], [1], [0, 0, 1, 1], [], []>} : vector<8x32xf32>, vector<32x32xf32>, vector<8x32xf32> -> vector<8x32xf32>
    %c0_10 = arith.constant 0 : index
    %c0_11 = arith.constant 0 : index
    %18 = vector.load %arg6[%c0_10, %c0_11] : memref<1x32xf32, #tpu.memory_space<vmem>>, vector<1x32xf32>
    %19 = vector.broadcast %18 : vector<1x32xf32> to vector<8x32xf32>
    %20 = arith.addf %17, %19 : vector<8x32xf32>
    %cst_12 = arith.constant 0.176776692 : f32
    %21 = vector.broadcast %cst_12 : f32 to vector<8x32xf32>
    %22 = arith.mulf %20, %21 : vector<8x32xf32>
    %23 = vector.shape_cast %22 : vector<8x32xf32> to vector<1x8x32xf32>
    %c0_13 = arith.constant 0 : index
    %c0_14 = arith.constant 0 : index
    %c0_15 = arith.constant 0 : index
    %24 = vector.load %arg13[%c0_13, %c0_14, %c0_15] : memref<1x32x128xf32, #tpu.memory_space<vmem>>, vector<1x32x128xf32>
    %cst_16 = arith.constant dense<0.000000e+00> : vector<1x8x128xf32>
    %25 = tpu.matmul %23, %24, %cst_16 {dimension_numbers = #tpu.dot_dimension_numbers<[2], [1], [1], [2], [0, 0, 0, 1, 1, 2], [0], [0]>} : vector<1x8x32xf32>, vector<1x32x128xf32>, vector<1x8x128xf32> -> vector<1x8x128xf32>
    %26 = tpu.iota {dimensions = array<i32: 2>} : vector<1x1x128xi32>
    %c8_i32 = arith.constant 8 : i32
    %27 = vector.broadcast %c8_i32 : i32 to vector<1x1x128xi32>
    %28 = arith.cmpi slt, %26, %27 : vector<1x1x128xi32>
    %cst_17 = arith.constant 0xFF800000 : f32
    %29 = vector.shape_cast %28 : vector<1x1x128xi1> to vector<1x1x128xi1>
    %30 = vector.broadcast %29 : vector<1x1x128xi1> to vector<1x8x128xi1>
    %31 = vector.broadcast %cst_17 : f32 to vector<1x8x128xf32>
    %32 = arith.select %30, %25, %31 : vector<1x8x128xi1>, vector<1x8x128xf32>
    %cst_18 = arith.constant dense<0xFF800000> : vector<1x8xf32>
    %33 = vector.multi_reduction <maximumf>, %32, %cst_18 [2] : vector<1x8x128xf32> to vector<1x8xf32>
    %34 = vector.shape_cast %33 : vector<1x8xf32> to vector<1x8x1xf32>
    %35 = vector.broadcast %34 : vector<1x8x1xf32> to vector<1x8x128xf32>
    %36 = arith.subf %32, %35 : vector<1x8x128xf32>
    %37 = math.exp %36 : vector<1x8x128xf32>
    %cst_19 = arith.constant dense<0.000000e+00> : vector<1x8xf32>
    %38 = vector.multi_reduction <add>, %37, %cst_19 [2] : vector<1x8x128xf32> to vector<1x8xf32>
    %39 = vector.shape_cast %38 : vector<1x8xf32> to vector<1x8x1xf32>
    %40 = tpu.reciprocal %39 {approx = true} : vector<1x8x1xf32> -> vector<1x8x1xf32>
    %41 = arith.mulf %39, %40 : vector<1x8x1xf32>
    %cst_20 = arith.constant 2.000000e+00 : f32
    %42 = vector.broadcast %cst_20 : f32 to vector<1x8x1xf32>
    %43 = arith.subf %42, %41 : vector<1x8x1xf32>
    %44 = arith.mulf %40, %43 : vector<1x8x1xf32>
    %45 = vector.broadcast %44 : vector<1x8x1xf32> to vector<1x8x128xf32>
    %46 = arith.mulf %37, %45 : vector<1x8x128xf32>
    %c0_21 = arith.constant 0 : index
    %c0_22 = arith.constant 0 : index
    %c0_23 = arith.constant 0 : index
    %47 = vector.load %arg14[%c0_21, %c0_22, %c0_23] : memref<1x128x32xf32, #tpu.memory_space<vmem>>, vector<1x128x32xf32>
    %cst_24 = arith.constant dense<0.000000e+00> : vector<1x8x32xf32>
    %48 = tpu.matmul %46, %47, %cst_24 {dimension_numbers = #tpu.dot_dimension_numbers<[2], [1], [1], [2], [0, 0, 0, 1, 1, 2], [0], [0]>} : vector<1x8x128xf32>, vector<1x128x32xf32>, vector<1x8x32xf32> -> vector<1x8x32xf32>
    %c0_25 = arith.constant 0 : index
    %c0_26 = arith.constant 0 : index
    %c0_27 = arith.constant 0 : index
    %49 = vector.load %arg11[%c0_25, %c0_26, %c0_27] : memref<1x8x32xf32, #tpu.memory_space<vmem>>, vector<1x8x32xf32>
    tpu.vector_store %arg11[%c0_25, %c0_26, %c0_27], %48 {strides = array<i32>} : memref<1x8x32xf32, #tpu.memory_space<vmem>>, vector<1x8x32xf32>,
    %c0_28 = arith.constant 0 : index
    %c0_29 = arith.constant 0 : index
    %c0_30 = arith.constant 0 : index
    %50 = vector.load %arg12[%c0_28, %c0_29, %c0_30] : memref<1x8x128xf32, #tpu.memory_space<vmem>>, vector<1x8x128xf32>
    tpu.vector_store %arg12[%c0_28, %c0_29, %c0_30], %46 {strides = array<i32>} : memref<1x8x128xf32, #tpu.memory_space<vmem>>, vector<1x8x128xf32>,
    return
  }
  func.func @transform_0(%arg0: i32, %arg1: i32) -> (i32, i32, i32) {
    %c0_i32 = arith.constant 0 : i32
    %c0_i32_0 = arith.constant 0 : i32
    return %arg0, %arg1, %c0_i32 : i32, i32, i32
  }
  func.func @transform_1(%arg0: i32, %arg1: i32) -> (i32, i32, i32) {
    %c0_i32 = arith.constant 0 : i32
    %c0_i32_0 = arith.constant 0 : i32
    %c0_i32_1 = arith.constant 0 : i32
    return %arg0, %c0_i32, %c0_i32_0 : i32, i32, i32
  }
  func.func @transform_2(%arg0: i32, %arg1: i32) -> (i32, i32, i32) {
    %c0_i32 = arith.constant 0 : i32
    %c0_i32_0 = arith.constant 0 : i32
    %c0_i32_1 = arith.constant 0 : i32
    return %arg0, %c0_i32, %c0_i32_0 : i32, i32, i32
  }
  func.func @transform_3(%arg0: i32, %arg1: i32) -> (i32, i32) {
    %c0_i32 = arith.constant 0 : i32
    %c0_i32_0 = arith.constant 0 : i32
    %c0_i32_1 = arith.constant 0 : i32
    return %c0_i32, %c0_i32_0 : i32, i32
  }
  func.func @transform_4(%arg0: i32, %arg1: i32) -> (i32, i32) {
    %c0_i32 = arith.constant 0 : i32
    %c0_i32_0 = arith.constant 0 : i32
    %c0_i32_1 = arith.constant 0 : i32
    return %c0_i32, %c0_i32_0 : i32, i32
  }
  func.func @transform_5(%arg0: i32, %arg1: i32) -> (i32, i32) {
    %c0_i32 = arith.constant 0 : i32
    %c0_i32_0 = arith.constant 0 : i32
    %c0_i32_1 = arith.constant 0 : i32
    return %c0_i32, %c0_i32_0 : i32, i32
  }
  func.func @transform_6(%arg0: i32, %arg1: i32) -> (i32, i32) {
    %c0_i32 = arith.constant 0 : i32
    %c0_i32_0 = arith.constant 0 : i32
    %c0_i32_1 = arith.constant 0 : i32
    return %c0_i32, %c0_i32_0 : i32, i32
  }
  func.func @transform_7(%arg0: i32, %arg1: i32) -> (i32, i32) {
    %c0_i32 = arith.constant 0 : i32
    %c0_i32_0 = arith.constant 0 : i32
    %c0_i32_1 = arith.constant 0 : i32
    return %c0_i32, %c0_i32_0 : i32, i32
  }
  func.func @transform_8(%arg0: i32, %arg1: i32) -> (i32, i32) {
    %c0_i32 = arith.constant 0 : i32
    %c0_i32_0 = arith.constant 0 : i32
    %c0_i32_1 = arith.constant 0 : i32
    return %c0_i32, %c0_i32_0 : i32, i32
  }
  func.func @transform_9(%arg0: i32, %arg1: i32) -> (i32, i32, i32) {
    %c0_i32 = arith.constant 0 : i32
    %c0_i32_0 = arith.constant 0 : i32
    return %arg0, %arg1, %c0_i32 : i32, i32, i32
  }
  func.func @transform_10(%arg0: i32, %arg1: i32) -> (i32, i32, i32) {
    %c0_i32 = arith.constant 0 : i32
    %c0_i32_0 = arith.constant 0 : i32
    return %arg0, %arg1, %c0_i32 : i32, i32, i32
  }
}

</mosaic_0001>

<llo_original>
// kernel: tpu_custom_call.1
$region0: #{tpu_custom_call.1}
  #allocation0 [shape = 'u32[]', space=smem, size = 0x4, offset = 0x4, fixed_abs, tag = 'smem constant byte address 0x4 - core index']
  #allocation1 [shape = 'u32[72,128]{1,0:T(1,128)}', space=vmem, size = 0x9000, scoped, tag = 'internal scratch']
  #allocation2 [shape = 'f32[1,32,128]{2,1,0:T(8,128)}', space=vmem, size = 0x4000, scoped, tag = 'scratch operand']
  #allocation3 [shape = 'f32[1,128,32]{2,1,0:T(8,128)}', space=vmem, size = 0x10000, scoped, tag = 'scratch operand']
  %s0 = inlined_call_operand.vmem [shape: f32[2,8,32], index: 0, kind: input, shape index: {}]
  %s1 = inlined_call_operand.vmem [shape: f32[2,128,32], index: 1, kind: input, shape index: {}]
  %s2 = inlined_call_operand.vmem [shape: f32[2,128,32], index: 2, kind: input, shape index: {}]
  %s3 = inlined_call_operand.vmem [shape: f32[32,32], index: 3, kind: input, shape index: {}]
  %s4 = inlined_call_operand.vmem [shape: f32[1,32], index: 4, kind: input, shape index: {}]
  %s5 = inlined_call_operand.vmem [shape: f32[32,32], index: 5, kind: input, shape index: {}]
  %s6 = inlined_call_operand.vmem [shape: f32[1,32], index: 6, kind: input, shape index: {}]
  %s7 = inlined_call_operand.vmem [shape: f32[32,32], index: 7, kind: input, shape index: {}]
  %s8 = inlined_call_operand.vmem [shape: f32[1,32], index: 8, kind: input, shape index: {}]
  %s9 = inlined_call_operand.hbm [shape: f32[2,8,32], index: 9, kind: output, shape index: {0}]
  %s10 = inlined_call_operand.hbm [shape: f32[2,8,128], index: 10, kind: output, shape index: {1}]
  %11 = xla_tuple %s9, %s10
  %s12 = sld [smem:[#allocation0]]
  $region81: #{tpu_custom_call.1} parent=0
    _
  %s14 = ssub.s32 1, %s12
  %s15 = scalar_select 0, %s14, %s12
  $region1: #{tpu_custom_call.1} parent=0
    #allocation4 [shape = 'u8[8192]{0}', space=vmem, size = 0x2000, scoped, tag = 'output window, operand 0']
    #allocation5 [shape = 's32[2]{0}', space=sflag, size = 0x8, scoped, tag = 'scoped memory for tpu_custom_call.1']
    #allocation6 [shape = 'u8[8192]{0}', space=vmem, size = 0x2000, scoped, tag = 'output window, operand 1']
    #allocation7 [shape = 's32[2]{0}', space=sflag, size = 0x8, scoped, tag = 'scoped memory for tpu_custom_call.1']
    %16 = vsyncpa [#allocation5], 0
    %s17 = scalar_lea.sflag [#allocation5], 1
    %18 = vsyncpa %s17, 0
    %19 = vsyncpa [#allocation7], 0
    %s20 = scalar_lea.sflag [#allocation7], 1
    %21 = vsyncpa %s20, 0
    loop: start=0, step=1, limit=4
    $region2: #{tpu_custom_call.1} parent=1 // loop_pre_header
      _
    $region3: #{tpu_custom_call.1} parent=1 // loop_header
      %s23 = sphi 0, %s27
      %p24 = scmp.ge.s32.totalorder %s23, 4
      %s30 = sphi 0, %s42
      %s31 = sphi 0, %s38
      %s32 = sphi 0, %s30
      %s33 = sphi 0, %s31
      %s34 = sphi 0, %s32
      %s35 = sphi 0, %s33
      %s47 = sphi 0, %s49
      %s50 = sphi 0, %s47
      %s51 = sphi 0, %s50
      %s67 = sphi 0, %s51
      %s73 = sphi 0, %s75
      %s76 = sphi 0, %s73
      %s77 = sphi 0, %s76
      %s93 = sphi 0, %s77
      %s99 = sphi 0, %s101
      %s102 = sphi 0, %s99
      %s103 = sphi 0, %s102
      %s119 = sphi 0, %s103
      %s123 = sphi 0, %s123
      %s125 = sphi 0, %s123
      %s126 = sphi 0, %s125
      %s140 = sphi 0, %s126
      %s144 = sphi 0, %s144
      %s146 = sphi 0, %s144
      %s147 = sphi 0, %s146
      %s161 = sphi 0, %s147
      %s165 = sphi 0, %s165
      %s167 = sphi 0, %s165
      %s168 = sphi 0, %s167
      %s182 = sphi 0, %s168
      %s186 = sphi 0, %s186
      %s188 = sphi 0, %s186
      %s189 = sphi 0, %s188
      %s203 = sphi 0, %s189
      %s207 = sphi 0, %s207
      %s209 = sphi 0, %s207
      %s210 = sphi 0, %s209
      %s224 = sphi 0, %s210
      %s228 = sphi 0, %s228
      %s230 = sphi 0, %s228
      %s231 = sphi 0, %s230
      %s245 = sphi 0, %s231
      %s253 = sphi 0, %s255
      %s256 = sphi 0, %s253
      %s257 = sphi 0, %s256
      %s273 = sphi 0, %s257
      %s281 = sphi 0, %s283
      %s284 = sphi 0, %s281
      %s285 = sphi 0, %s284
      %s301 = sphi 0, %s285
    $region4: #{tpu_custom_call.1} parent=1 // loop_header_branch
      %26 = sbr.rel (%p24) target = $region8
    $region5: #{tpu_custom_call.1} parent=1 // loop_body
      %s28 = ssub.s32 %s23, 1
      %s29 = ssub.s32 %s23, 2
      %s36 = sadd.s32 1, %s31
      %p37 = scmp.ge.s32.totalorder %s36, 1
      %s38 = scalar_select %p37, 0, %s36
      %s39 = sadd.s32 1, %s30
      %s40 = scalar_select %p37, %s39, %s30
      %p41 = scmp.ge.s32.totalorder %s40, 2
      %s42 = scalar_select %p41, 0, %s40
      %s43 = ssub.s32 %s30, %s42
      %s44 = ssub.s32 %s31, %s38
      %s45 = sor.u32 %s43, %s44
      %p46 = scmp.eq.s32.totalorder %s45, 0
      %s48 = sadd.s32 %s47, 1
      %s49 = scalar_select %p46, %s47, %s48
      %p52 = pneg %p46
      %p53 = scmp.eq.s32.totalorder %s23, 1
      %p54 = por %p52, %p53
      %p55 = scmp.ne.s32.totalorder %s47, %s50
      %p56 = scmp.eq.s32.totalorder %s23, 0
      %p57 = por %p55, %p56
      %p58 = scmp.ne.s32.totalorder %s47, %s50
      %p59 = scmp.eq.s32.totalorder %s28, 1
      %p60 = por %p58, %p59
      %p61 = scmp.ne.s32.totalorder %s50, %s51
      %p62 = scmp.eq.s32.totalorder %s28, 0
      %p63 = por %p61, %p62
      %p64 = scmp.ne.s32.totalorder %s50, %s51
      %p65 = scmp.eq.s32.totalorder %s29, 1
      %p66 = por %p64, %p65
      %p68 = scmp.ne.s32.totalorder %s51, %s67
      %p69 = scmp.eq.s32.totalorder %s29, 0
      %p70 = por %p68, %p69
      %s71 = ssub.s32 %s30, %s42
      %p72 = scmp.eq.s32.totalorder %s71, 0
      %s74 = sadd.s32 %s73, 1
      %s75 = scalar_select %p72, %s73, %s74
      %p78 = pneg %p72
      %p79 = scmp.eq.s32.totalorder %s23, 1
      %p80 = por %p78, %p79
      %p81 = scmp.ne.s32.totalorder %s73, %s76
      %p82 = scmp.eq.s32.totalorder %s23, 0
      %p83 = por %p81, %p82
      %p84 = scmp.ne.s32.totalorder %s73, %s76
      %p85 = scmp.eq.s32.totalorder %s28, 1
      %p86 = por %p84, %p85
      %p87 = scmp.ne.s32.totalorder %s76, %s77
      %p88 = scmp.eq.s32.totalorder %s28, 0
      %p89 = por %p87, %p88
      %p90 = scmp.ne.s32.totalorder %s76, %s77
      %p91 = scmp.eq.s32.totalorder %s29, 1
      %p92 = por %p90, %p91
      %p94 = scmp.ne.s32.totalorder %s77, %s93
      %p95 = scmp.eq.s32.totalorder %s29, 0
      %p96 = por %p94, %p95
      %s97 = ssub.s32 %s30, %s42
      %p98 = scmp.eq.s32.totalorder %s97, 0
      %s100 = sadd.s32 %s99, 1
      %s101 = scalar_select %p98, %s99, %s100
      %p104 = pneg %p98
      %p105 = scmp.eq.s32.totalorder %s23, 1
      %p106 = por %p104, %p105
      %p107 = scmp.ne.s32.totalorder %s99, %s102
      %p108 = scmp.eq.s32.totalorder %s23, 0
      %p109 = por %p107, %p108
      %p110 = scmp.ne.s32.totalorder %s99, %s102
      %p111 = scmp.eq.s32.totalorder %s28, 1
      %p112 = por %p110, %p111
      %p113 = scmp.ne.s32.totalorder %s102, %s103
      %p114 = scmp.eq.s32.totalorder %s28, 0
      %p115 = por %p113, %p114
      %p116 = scmp.ne.s32.totalorder %s102, %s103
      %p117 = scmp.eq.s32.totalorder %s29, 1
      %p118 = por %p116, %p117
      %p120 = scmp.ne.s32.totalorder %s103, %s119
      %p121 = scmp.eq.s32.totalorder %s29, 0
      %p122 = por %p120, %p121
      %s124 = sadd.s32 %s123, 1
      %p127 = scmp.eq.s32.totalorder %s23, 1
      %p128 = scmp.ne.s32.totalorder %s123, %s125
      %p129 = scmp.eq.s32.totalorder %s23, 0
      %p130 = por %p128, %p129
      %p131 = scmp.ne.s32.totalorder %s123, %s125
      %p132 = scmp.eq.s32.totalorder %s28, 1
      %p133 = por %p131, %p132
      %p134 = scmp.ne.s32.totalorder %s125, %s126
      %p135 = scmp.eq.s32.totalorder %s28, 0
      %p136 = por %p134, %p135
      %p137 = scmp.ne.s32.totalorder %s125, %s126
      %p138 = scmp.eq.s32.totalorder %s29, 1
      %p139 = por %p137, %p138
      %p141 = scmp.ne.s32.totalorder %s126, %s140
      %p142 = scmp.eq.s32.totalorder %s29, 0
      %p143 = por %p141, %p142
      %s145 = sadd.s32 %s144, 1
      %p148 = scmp.eq.s32.totalorder %s23, 1
      %p149 = scmp.ne.s32.totalorder %s144, %s146
      %p150 = scmp.eq.s32.totalorder %s23, 0
      %p151 = por %p149, %p150
      %p152 = scmp.ne.s32.totalorder %s144, %s146
      %p153 = scmp.eq.s32.totalorder %s28, 1
      %p154 = por %p152, %p153
      %p155 = scmp.ne.s32.totalorder %s146, %s147
      %p156 = scmp.eq.s32.totalorder %s28, 0
      %p157 = por %p155, %p156
      %p158 = scmp.ne.s32.totalorder %s146, %s147
      %p159 = scmp.eq.s32.totalorder %s29, 1
      %p160 = por %p158, %p159
      %p162 = scmp.ne.s32.totalorder %s147, %s161
      %p163 = scmp.eq.s32.totalorder %s29, 0
      %p164 = por %p162, %p163
      %s166 = sadd.s32 %s165, 1
      %p169 = scmp.eq.s32.totalorder %s23, 1
      %p170 = scmp.ne.s32.totalorder %s165, %s167
      %p171 = scmp.eq.s32.totalorder %s23, 0
      %p172 = por %p170, %p171
      %p173 = scmp.ne.s32.totalorder %s165, %s167
      %p174 = scmp.eq.s32.totalorder %s28, 1
      %p175 = por %p173, %p174
      %p176 = scmp.ne.s32.totalorder %s167, %s168
      %p177 = scmp.eq.s32.totalorder %s28, 0
      %p178 = por %p176, %p177
      %p179 = scmp.ne.s32.totalorder %s167, %s168
      %p180 = scmp.eq.s32.totalorder %s29, 1
      %p181 = por %p179, %p180
      %p183 = scmp.ne.s32.totalorder %s168, %s182
      %p184 = scmp.eq.s32.totalorder %s29, 0
      %p185 = por %p183, %p184
      %s187 = sadd.s32 %s186, 1
      %p190 = scmp.eq.s32.totalorder %s23, 1
      %p191 = scmp.ne.s32.totalorder %s186, %s188
      %p192 = scmp.eq.s32.totalorder %s23, 0
      %p193 = por %p191, %p192
      %p194 = scmp.ne.s32.totalorder %s186, %s188
      %p195 = scmp.eq.s32.totalorder %s28, 1
      %p196 = por %p194, %p195
      %p197 = scmp.ne.s32.totalorder %s188, %s189
      %p198 = scmp.eq.s32.totalorder %s28, 0
      %p199 = por %p197, %p198
      %p200 = scmp.ne.s32.totalorder %s188, %s189
      %p201 = scmp.eq.s32.totalorder %s29, 1
      %p202 = por %p200, %p201
      %p204 = scmp.ne.s32.totalorder %s189, %s203
      %p205 = scmp.eq.s32.totalorder %s29, 0
      %p206 = por %p204, %p205
      %s208 = sadd.s32 %s207, 1
      %p211 = scmp.eq.s32.totalorder %s23, 1
      %p212 = scmp.ne.s32.totalorder %s207, %s209
      %p213 = scmp.eq.s32.totalorder %s23, 0
      %p214 = por %p212, %p213
      %p215 = scmp.ne.s32.totalorder %s207, %s209
      %p216 = scmp.eq.s32.totalorder %s28, 1
      %p217 = por %p215, %p216
      %p218 = scmp.ne.s32.totalorder %s209, %s210
      %p219 = scmp.eq.s32.totalorder %s28, 0
      %p220 = por %p218, %p219
      %p221 = scmp.ne.s32.totalorder %s209, %s210
      %p222 = scmp.eq.s32.totalorder %s29, 1
      %p223 = por %p221, %p222
      %p225 = scmp.ne.s32.totalorder %s210, %s224
      %p226 = scmp.eq.s32.totalorder %s29, 0
      %p227 = por %p225, %p226
      %s229 = sadd.s32 %s228, 1
      %p232 = scmp.eq.s32.totalorder %s23, 1
      %p233 = scmp.ne.s32.totalorder %s228, %s230
      %p234 = scmp.eq.s32.totalorder %s23, 0
      %p235 = por %p233, %p234
      %p236 = scmp.ne.s32.totalorder %s228, %s230
      %p237 = scmp.eq.s32.totalorder %s28, 1
      %p238 = por %p236, %p237
      %p239 = scmp.ne.s32.totalorder %s230, %s231
      %p240 = scmp.eq.s32.totalorder %s28, 0
      %p241 = por %p239, %p240
      %p242 = scmp.ne.s32.totalorder %s230, %s231
      %p243 = scmp.eq.s32.totalorder %s29, 1
      %p244 = por %p242, %p243
      %p246 = scmp.ne.s32.totalorder %s231, %s245
      %p247 = scmp.eq.s32.totalorder %s29, 0
      %p248 = por %p246, %p247
      %s249 = ssub.s32 %s30, %s42
      %s250 = ssub.s32 %s31, %s38
      %s251 = sor.u32 %s249, %s250
      %p252 = scmp.eq.s32.totalorder %s251, 0
      %s254 = sadd.s32 %s253, 1
      %s255 = scalar_select %p252, %s253, %s254
      %p258 = pneg %p252
      %p259 = scmp.eq.s32.totalorder %s23, 1
      %p260 = por %p258, %p259
      %p261 = scmp.ne.s32.totalorder %s253, %s256
      %p262 = scmp.eq.s32.totalorder %s23, 0
      %p263 = por %p261, %p262
      %p264 = scmp.ne.s32.totalorder %s253, %s256
      %p265 = scmp.eq.s32.totalorder %s28, 1
      %p266 = por %p264, %p265
      %p267 = scmp.ne.s32.totalorder %s256, %s257
      %p268 = scmp.eq.s32.totalorder %s28, 0
      %p269 = por %p267, %p268
      %p270 = scmp.ne.s32.totalorder %s256, %s257
      %p271 = scmp.eq.s32.totalorder %s29, 1
      %p272 = por %p270, %p271
      %p274 = scmp.ne.s32.totalorder %s257, %s273
      %p275 = scmp.eq.s32.totalorder %s29, 0
      %p276 = por %p274, %p275
      %s277 = ssub.s32 %s30, %s42
      %s278 = ssub.s32 %s31, %s38
      %s279 = sor.u32 %s277, %s278
      %p280 = scmp.eq.s32.totalorder %s279, 0
      %s282 = sadd.s32 %s281, 1
      %s283 = scalar_select %p280, %s281, %s282
      %p286 = pneg %p280
      %p287 = scmp.eq.s32.totalorder %s23, 1
      %p288 = por %p286, %p287
      %p289 = scmp.ne.s32.totalorder %s281, %s284
      %p290 = scmp.eq.s32.totalorder %s23, 0
      %p291 = por %p289, %p290
      %p292 = scmp.ne.s32.totalorder %s281, %s284
      %p293 = scmp.eq.s32.totalorder %s28, 1
      %p294 = por %p292, %p293
      %p295 = scmp.ne.s32.totalorder %s284, %s285
      %p296 = scmp.eq.s32.totalorder %s28, 0
      %p297 = por %p295, %p296
      %p298 = scmp.ne.s32.totalorder %s284, %s285
      %p299 = scmp.eq.s32.totalorder %s29, 1
      %p300 = por %p298, %p299
      %p302 = scmp.ne.s32.totalorder %s285, %s301
      %p303 = scmp.eq.s32.totalorder %s29, 0
      %p304 = por %p302, %p303
      %p305 = scmp.le.s32.totalorder 1, %s23
      %p306 = scmp.lt.s32.totalorder %s23, 3
      %p307 = pnand %p305, %p306
      %p308 = pneg %p307
      // Predicated region
      $region9: #{tpu_custom_call.1} parent=5 // pred_check
        _
      $region10: #{tpu_custom_call.1} parent=5 // pred_check_branch
        %310 = sbr.rel (%p307) target = $region12
      $region11: #{tpu_custom_call.1} parent=5 // pred_region
        %s311 = ssub.s32 %s23, 1
        // Predicated region
        $region13: #{tpu_custom_call.1} parent=11 // pred_check
          %p312 = pneg %p89
        $region14: #{tpu_custom_call.1} parent=11 // pred_check_branch
          %314 = sbr.rel (%p312) target = $region16
        $region15: #{tpu_custom_call.1} parent=11 // pred_region
          %p315 = scmp.lt.s32.totalorder %s32, 1
          %s316 = scalar_select %p315, %s32, 1
          %s317 = smul.addr %s316, 16
          %s318 = smul.addr %s317, 8
          %s319 = scalar_lea.vmem %s1, %s318
        $region16: #{tpu_custom_call.1} parent=11 // pred_fallthru
          _
        // Predicated region
        $region17: #{tpu_custom_call.1} parent=11 // pred_check
          %p320 = pneg %p115
        $region18: #{tpu_custom_call.1} parent=11 // pred_check_branch
          %322 = sbr.rel (%p320) target = $region20
        $region19: #{tpu_custom_call.1} parent=11 // pred_region
          %p323 = scmp.lt.s32.totalorder %s32, 1
          %s324 = scalar_select %p323, %s32, 1
          %s325 = smul.addr %s324, 16
          %s326 = smul.addr %s325, 8
          %s327 = scalar_lea.vmem %s2, %s326
        $region20: #{tpu_custom_call.1} parent=11 // pred_fallthru
          _
        // Predicated region
        $region21: #{tpu_custom_call.1} parent=11 // pred_check
          %p328 = pneg %p136
        $region22: #{tpu_custom_call.1} parent=11 // pred_check_branch
          %330 = sbr.rel (%p328) target = $region24
        $region23: #{tpu_custom_call.1} parent=11 // pred_region
          _
        $region24: #{tpu_custom_call.1} parent=11 // pred_fallthru
          _
        // Predicated region
        $region25: #{tpu_custom_call.1} parent=11 // pred_check
          %p331 = pneg %p157
        $region26: #{tpu_custom_call.1} parent=11 // pred_check_branch
          %333 = sbr.rel (%p331) target = $region28
        $region27: #{tpu_custom_call.1} parent=11 // pred_region
          _
        $region28: #{tpu_custom_call.1} parent=11 // pred_fallthru
          _
        // Predicated region
        $region29: #{tpu_custom_call.1} parent=11 // pred_check
          %p334 = pneg %p178
        $region30: #{tpu_custom_call.1} parent=11 // pred_check_branch
          %336 = sbr.rel (%p334) target = $region32
        $region31: #{tpu_custom_call.1} parent=11 // pred_region
          _
        $region32: #{tpu_custom_call.1} parent=11 // pred_fallthru
          _
        // Predicated region
        $region33: #{tpu_custom_call.1} parent=11 // pred_check
          %p337 = pneg %p199
        $region34: #{tpu_custom_call.1} parent=11 // pred_check_branch
          %339 = sbr.rel (%p337) target = $region36
        $region35: #{tpu_custom_call.1} parent=11 // pred_region
          _
        $region36: #{tpu_custom_call.1} parent=11 // pred_fallthru
          _
        // Predicated region
        $region37: #{tpu_custom_call.1} parent=11 // pred_check
          %p340 = pneg %p220
        $region38: #{tpu_custom_call.1} parent=11 // pred_check_branch
          %342 = sbr.rel (%p340) target = $region40
        $region39: #{tpu_custom_call.1} parent=11 // pred_region
          _
        $region40: #{tpu_custom_call.1} parent=11 // pred_fallthru
          _
        // Predicated region
        $region41: #{tpu_custom_call.1} parent=11 // pred_check
          %p343 = pneg %p241
        $region42: #{tpu_custom_call.1} parent=11 // pred_check_branch
          %345 = sbr.rel (%p343) target = $region44
        $region43: #{tpu_custom_call.1} parent=11 // pred_region
          _
        $region44: #{tpu_custom_call.1} parent=11 // pred_fallthru
          _
      $region12: #{tpu_custom_call.1} parent=5 // pred_fallthru
        _
      %p346 = scmp.lt.s32.totalorder %s23, 2
      // Predicated region
      $region45: #{tpu_custom_call.1} parent=5 // pred_check
        %p347 = pneg %p346
      $region46: #{tpu_custom_call.1} parent=5 // pred_check_branch
        %349 = sbr.rel (%p347) target = $region48
      $region47: #{tpu_custom_call.1} parent=5 // pred_region
        // Predicated region
        $region49: #{tpu_custom_call.1} parent=47 // pred_check
          %p350 = pneg %p57
        $region50: #{tpu_custom_call.1} parent=47 // pred_check_branch
          %352 = sbr.rel (%p350) target = $region52
        $region51: #{tpu_custom_call.1} parent=47 // pred_region
          %p353 = scmp.lt.s32.totalorder %s30, 1
          %s354 = scalar_select %p353, %s30, 1
          %p355 = scmp.lt.s32.totalorder %s31, 0
          %s356 = scalar_select %p355, %s31, 0
          %s357 = sadd.s32 %s356, %s354
          %s358 = smul.addr %s357, 8
          %s359 = scalar_lea.vmem %s0, %s358
        $region52: #{tpu_custom_call.1} parent=47 // pred_fallthru
          _
      $region48: #{tpu_custom_call.1} parent=5 // pred_fallthru
        _
      %p360 = scmp.le.s32.totalorder 1, %s23
      %p361 = scmp.lt.s32.totalorder %s23, 3
      %p362 = pnand %p360, %p361
      %p363 = pneg %p362
      // Predicated region
      $region53: #{tpu_custom_call.1} parent=5 // pred_check
        _
      $region54: #{tpu_custom_call.1} parent=5 // pred_check_branch
        %365 = sbr.rel (%p362) target = $region56
      $region55: #{tpu_custom_call.1} parent=5 // pred_region
        %s366 = ssub.s32 %s23, 1
        %p367 = scmp.lt.s32.totalorder %s32, 1
        %s368 = scalar_select %p367, %s32, 1
        %p369 = scmp.lt.s32.totalorder %s33, 0
        %s370 = scalar_select %p369, %s33, 0
        %s371 = sadd.s32 %s370, %s368
        %s372 = smul.addr %s371, 8
        %s373 = scalar_lea.vmem %s0, %s372
        %p374 = pneg %p63
        %p375 = pneg %p60
        %p376 = scmp.lt.s32.totalorder %s32, 1
        %s377 = scalar_select %p376, %s32, 1
        %s378 = smul.addr %s377, 16
        %s379 = smul.addr %s378, 8
        %s380 = scalar_lea.vmem %s1, %s379
        %p381 = pneg %p89
        %p382 = pneg %p86
        %p383 = scmp.lt.s32.totalorder %s32, 1
        %s384 = scalar_select %p383, %s32, 1
        %s385 = smul.addr %s384, 16
        %s386 = smul.addr %s385, 8
        %s387 = scalar_lea.vmem %s2, %s386
        %p388 = pneg %p115
        %p389 = pneg %p112
        %p390 = pneg %p136
        %p391 = pneg %p133
        %p392 = pneg %p157
        %p393 = pneg %p154
        %p394 = pneg %p178
        %p395 = pneg %p175
        %p396 = pneg %p199
        %p397 = pneg %p196
        %p398 = pneg %p220
        %p399 = pneg %p217
        %p400 = pneg %p241
        %p401 = pneg %p238
        %p402 = pneg %p269
        %p403 = pneg %p266
        %s404 = sand.u32 %s256, 1
        %s405 = scalar_lea.sflag [#allocation5], %s404
        %s406 = sand.u32 %s256, 1
        %s407 = smul.addr %s406, 8
        %s408 = scalar_lea.vmem [#allocation4], %s407
        %p409 = pneg %p297
        %p410 = pneg %p294
        %s411 = sand.u32 %s284, 1
        %s412 = scalar_lea.sflag [#allocation7], %s411
        %s413 = sand.u32 %s284, 1
        %s414 = smul.addr %s413, 8
        %s415 = scalar_lea.vmem [#allocation6], %s414
        %p416 = scmp.lt.s32.totalorder %s32, 1
        %s417 = scalar_select %p416, %s32, 1
        %p418 = scmp.lt.s32.totalorder %s33, 0
        %s419 = scalar_select %p418, %s33, 0
        %s420 = sadd.s32 %s419, %s417
        %s421 = smul.addr %s420, 8
        %s422 = scalar_lea.vmem %s0, %s421
        %p423 = scmp.lt.s32.totalorder %s32, 1
        %s424 = scalar_select %p423, %s32, 1
        %s425 = smul.addr %s424, 16
        %s426 = smul.addr %s425, 8
        %s427 = scalar_lea.vmem %s1, %s426
        %p428 = scmp.lt.s32.totalorder %s32, 1
        %s429 = scalar_select %p428, %s32, 1
        %s430 = smul.addr %s429, 16
        %s431 = smul.addr %s430, 8
        %s432 = scalar_lea.vmem %s2, %s431
        %p433 = scmp.eq.s32.totalorder %s33, 0
        // Predicated region
        $region57: #{tpu_custom_call.1} parent=55 // pred_check
          %p434 = pneg %p433
        $region58: #{tpu_custom_call.1} parent=55 // pred_check_branch
          %436 = sbr.rel (%p434) target = $region60
        $region59: #{tpu_custom_call.1} parent=55 // pred_region
          %v437 = vld [vmem:[%s427] sm:$0xff]
          %v438 = vld [vmem:[%s427 + $0x8] sm:$0xff]
          %v439 = vld [vmem:[%s427 + $0x10] sm:$0xff]
          %v440 = vld [vmem:[%s427 + $0x18] sm:$0xff]
          %v441 = vld [vmem:[%s427 + $0x20] sm:$0xff]
          %v442 = vld [vmem:[%s427 + $0x28] sm:$0xff]
          %v443 = vld [vmem:[%s427 + $0x30] sm:$0xff]
          %v444 = vld [vmem:[%s427 + $0x38] sm:$0xff]
          %v445 = vld [vmem:[%s427 + $0x40] sm:$0xff]
          %v446 = vld [vmem:[%s427 + $0x48] sm:$0xff]
          %v447 = vld [vmem:[%s427 + $0x50] sm:$0xff]
          %v448 = vld [vmem:[%s427 + $0x58] sm:$0xff]
          %v449 = vld [vmem:[%s427 + $0x60] sm:$0xff]
          %v450 = vld [vmem:[%s427 + $0x68] sm:$0xff]
          %v451 = vld [vmem:[%s427 + $0x70] sm:$0xff]
          %v452 = vld [vmem:[%s427 + $0x78] sm:$0xff]
          %v453 = vld [vmem:[%s432] sm:$0xff]
          %v454 = vld [vmem:[%s432 + $0x8] sm:$0xff]
          %v455 = vld [vmem:[%s432 + $0x10] sm:$0xff]
          %v456 = vld [vmem:[%s432 + $0x18] sm:$0xff]
          %v457 = vld [vmem:[%s432 + $0x20] sm:$0xff]
          %v458 = vld [vmem:[%s432 + $0x28] sm:$0xff]
          %v459 = vld [vmem:[%s432 + $0x30] sm:$0xff]
          %v460 = vld [vmem:[%s432 + $0x38] sm:$0xff]
          %v461 = vld [vmem:[%s432 + $0x40] sm:$0xff]
          %v462 = vld [vmem:[%s432 + $0x48] sm:$0xff]
          %v463 = vld [vmem:[%s432 + $0x50] sm:$0xff]
          %v464 = vld [vmem:[%s432 + $0x58] sm:$0xff]
          %v465 = vld [vmem:[%s432 + $0x60] sm:$0xff]
          %v466 = vld [vmem:[%s432 + $0x68] sm:$0xff]
          %v467 = vld [vmem:[%s432 + $0x70] sm:$0xff]
          %v468 = vld [vmem:[%s432 + $0x78] sm:$0xff]
          %v469 = vld [vmem:[%s5] sm:$0xff]
          %v470 = vld [vmem:[%s5 + $0x8] sm:$0xff]
          %v471 = vld [vmem:[%s5 + $0x10] sm:$0xff]
          %v472 = vld [vmem:[%s5 + $0x18] sm:$0xff]
          %v473 = vld [vmem:[%s6] sm:$0x1]
          %v475 = vperm.slane %v473, 0
          %vm477 = vcmask 261120
          %v479 = vsel %vm477, %v437, 0
          %v482 = vsel %vm477, %v438, 0
          %v485 = vsel %vm477, %v439, 0
          %v488 = vsel %vm477, %v440, 0
          %v491 = vsel %vm477, %v441, 0
          %v494 = vsel %vm477, %v442, 0
          %v497 = vsel %vm477, %v443, 0
          %v500 = vsel %vm477, %v444, 0
          %v503 = vsel %vm477, %v445, 0
          %v506 = vsel %vm477, %v446, 0
          %v509 = vsel %vm477, %v447, 0
          %v512 = vsel %vm477, %v448, 0
          %v515 = vsel %vm477, %v449, 0
          %v518 = vsel %vm477, %v450, 0
          %v521 = vsel %vm477, %v451, 0
          %v524 = vsel %vm477, %v452, 0
          %526 = vmatpush.msra.mxu0 0.0
          %527 = vmatpush.msra.mxu0 0.0
          %528 = vmatpush.msra.mxu0 0.0
          %529 = vmatpush.msra.mxu0 0.0
          %530 = vmatpush.msra.mxu0 0.0
          %531 = vmatpush.msra.mxu0 0.0
          %532 = vmatpush.msra.mxu0 0.0
          %533 = vmatpush.msra.mxu0 0.0
          %534 = vmatpush.msra.mxu0 0.0
          %535 = vmatpush.msra.mxu0 0.0
          %536 = vmatpush.msra.mxu0 0.0
          %537 = vmatpush.msra.mxu0 0.0
          %538 = vmatpush.msra.mxu0 %v472
          %539 = vmatpush.msra.mxu0 %v471
          %540 = vmatpush.msra.mxu0 %v470
          %541 = vmatpush.msra.mxu0 %v469
          %542 = vmatmul.f32.gmra.mxu0 %v479
          %v543 = vpop.f32.mrf.mxu0
          %v544 = vadd.f32 %v475, %v543
          %545 = vmatmul.f32.gmra.mxu0 %v482
          %v546 = vpop.f32.mrf.mxu0
          %v547 = vadd.f32 %v475, %v546
          %548 = vmatmul.f32.gmra.mxu0 %v485
          %v549 = vpop.f32.mrf.mxu0
          %v550 = vadd.f32 %v475, %v549
          %551 = vmatmul.f32.gmra.mxu0 %v488
          %v552 = vpop.f32.mrf.mxu0
          %v553 = vadd.f32 %v475, %v552
          %554 = vmatmul.f32.gmra.mxu0 %v491
          %v555 = vpop.f32.mrf.mxu0
          %v556 = vadd.f32 %v475, %v555
          %557 = vmatmul.f32.gmra.mxu0 %v494
          %v558 = vpop.f32.mrf.mxu0
          %v559 = vadd.f32 %v475, %v558
          %560 = vmatmul.f32.gmra.mxu0 %v497
          %v561 = vpop.f32.mrf.mxu0
          %v562 = vadd.f32 %v475, %v561
          %563 = vmatmul.f32.gmra.mxu0 %v500
          %v564 = vpop.f32.mrf.mxu0
          %v565 = vadd.f32 %v475, %v564
          %566 = vmatmul.f32.gmra.mxu0 %v503
          %v567 = vpop.f32.mrf.mxu0
          %v568 = vadd.f32 %v475, %v567
          %569 = vmatmul.f32.gmra.mxu0 %v506
          %v570 = vpop.f32.mrf.mxu0
          %v571 = vadd.f32 %v475, %v570
          %572 = vmatmul.f32.gmra.mxu0 %v509
          %v573 = vpop.f32.mrf.mxu0
          %v574 = vadd.f32 %v475, %v573
          %575 = vmatmul.f32.gmra.mxu0 %v512
          %v576 = vpop.f32.mrf.mxu0
          %v577 = vadd.f32 %v475, %v576
          %578 = vmatmul.f32.gmra.mxu0 %v515
          %v579 = vpop.f32.mrf.mxu0
          %v580 = vadd.f32 %v475, %v579
          %581 = vmatmul.f32.gmra.mxu0 %v518
          %v582 = vpop.f32.mrf.mxu0
          %v583 = vadd.f32 %v475, %v582
          %584 = vmatmul.f32.gmra.mxu0 %v521
          %v585 = vpop.f32.mrf.mxu0
          %v586 = vadd.f32 %v475, %v585
          %587 = vmatmul.f32.gmra.mxu0 %v524
          %v588 = vpop.f32.mrf.mxu0
          %v589 = vadd.f32 %v475, %v588
          %590 = vdwg.mxu0
          %591 = vxpose.xlu0.b32.start [1/16] %v544, 128
          %592 = vxpose.xlu0.b32.cont [2/16] %v547, 128
          %593 = vxpose.xlu0.b32.cont [3/16] %v550, 128
          %594 = vxpose.xlu0.b32.cont [4/16] %v553, 128
          %595 = vxpose.xlu0.b32.cont [5/16] %v556, 128
          %596 = vxpose.xlu0.b32.cont [6/16] %v559, 128
          %597 = vxpose.xlu0.b32.cont [7/16] %v562, 128
          %598 = vxpose.xlu0.b32.cont [8/16] %v565, 128
          %599 = vxpose.xlu0.b32.cont [9/16] %v568, 128
          %600 = vxpose.xlu0.b32.cont [10/16] %v571, 128
          %601 = vxpose.xlu0.b32.cont [11/16] %v574, 128
          %602 = vxpose.xlu0.b32.cont [12/16] %v577, 128
          %603 = vxpose.xlu0.b32.cont [13/16] %v580, 128
          %604 = vxpose.xlu0.b32.cont [14/16] %v583, 128
          %605 = vxpose.xlu0.b32.cont [15/16] %v586, 128
          %606 = vxpose.xlu0.b32.end [16/16] %v589, 128
          %v607 = vpop.trf.xlu0
          %v608 = vpop.trf.xlu0
          %v609 = vpop.trf.xlu0
          %v610 = vpop.trf.xlu0
          %v611 = vpop.trf.xlu0
          %v612 = vpop.trf.xlu0
          %v613 = vpop.trf.xlu0
          %v614 = vpop.trf.xlu0
          %v615 = vpop.trf.xlu0
          %v616 = vpop.trf.xlu0
          %v617 = vpop.trf.xlu0
          %v618 = vpop.trf.xlu0
          %v619 = vpop.trf.xlu0
          %v620 = vpop.trf.xlu0
          %v621 = vpop.trf.xlu0
          %v622 = vpop.trf.xlu0
          %623 = vst [vmem:[#allocation2] sm:$0xff] %v607
          %624 = vst [vmem:[#allocation2 + $0x8] sm:$0xff] %v608
          %625 = vst [vmem:[#allocation2 + $0x10] sm:$0xff] %v609
          %626 = vst [vmem:[#allocation2 + $0x18] sm:$0xff] %v610
          %v627 = vld [vmem:[%s7] sm:$0xff]
          %v628 = vld [vmem:[%s7 + $0x8] sm:$0xff]
          %v629 = vld [vmem:[%s7 + $0x10] sm:$0xff]
          %v630 = vld [vmem:[%s7 + $0x18] sm:$0xff]
          %v631 = vld [vmem:[%s8] sm:$0x1]
          %v633 = vperm.slane %v631, 0
          %v636 = vsel %vm477, %v453, 0
          %v639 = vsel %vm477, %v454, 0
          %v642 = vsel %vm477, %v455, 0
          %v645 = vsel %vm477, %v456, 0
          %v648 = vsel %vm477, %v457, 0
          %v651 = vsel %vm477, %v458, 0
          %v654 = vsel %vm477, %v459, 0
          %v657 = vsel %vm477, %v460, 0
          %v660 = vsel %vm477, %v461, 0
          %v663 = vsel %vm477, %v462, 0
          %v666 = vsel %vm477, %v463, 0
          %v669 = vsel %vm477, %v464, 0
          %v672 = vsel %vm477, %v465, 0
          %v675 = vsel %vm477, %v466, 0
          %v678 = vsel %vm477, %v467, 0
          %v681 = vsel %vm477, %v468, 0
          %683 = vmatpush.msra.mxu0 0.0
          %684 = vmatpush.msra.mxu0 0.0
          %685 = vmatpush.msra.mxu0 0.0
          %686 = vmatpush.msra.mxu0 0.0
          %687 = vmatpush.msra.mxu0 0.0
          %688 = vmatpush.msra.mxu0 0.0
          %689 = vmatpush.msra.mxu0 0.0
          %690 = vmatpush.msra.mxu0 0.0
          %691 = vmatpush.msra.mxu0 0.0
          %692 = vmatpush.msra.mxu0 0.0
          %693 = vmatpush.msra.mxu0 0.0
          %694 = vmatpush.msra.mxu0 0.0
          %695 = vmatpush.msra.mxu0 %v630
          %696 = vmatpush.msra.mxu0 %v629
          %697 = vmatpush.msra.mxu0 %v628
          %698 = vmatpush.msra.mxu0 %v627
          %699 = vmatmul.f32.gmra.mxu0 %v636
          %v700 = vpop.f32.mrf.mxu0
          %v701 = vadd.f32 %v633, %v700
          %702 = vmatmul.f32.gmra.mxu0 %v639
          %v703 = vpop.f32.mrf.mxu0
          %v704 = vadd.f32 %v633, %v703
          %705 = vmatmul.f32.gmra.mxu0 %v642
          %v706 = vpop.f32.mrf.mxu0
          %v707 = vadd.f32 %v633, %v706
          %708 = vmatmul.f32.gmra.mxu0 %v645
          %v709 = vpop.f32.mrf.mxu0
          %v710 = vadd.f32 %v633, %v709
          %711 = vmatmul.f32.gmra.mxu0 %v648
          %v712 = vpop.f32.mrf.mxu0
          %v713 = vadd.f32 %v633, %v712
          %714 = vmatmul.f32.gmra.mxu0 %v651
          %v715 = vpop.f32.mrf.mxu0
          %v716 = vadd.f32 %v633, %v715
          %717 = vmatmul.f32.gmra.mxu0 %v654
          %v718 = vpop.f32.mrf.mxu0
          %v719 = vadd.f32 %v633, %v718
          %720 = vmatmul.f32.gmra.mxu0 %v657
          %v721 = vpop.f32.mrf.mxu0
          %v722 = vadd.f32 %v633, %v721
          %723 = vmatmul.f32.gmra.mxu0 %v660
          %v724 = vpop.f32.mrf.mxu0
          %v725 = vadd.f32 %v633, %v724
          %726 = vmatmul.f32.gmra.mxu0 %v663
          %v727 = vpop.f32.mrf.mxu0
          %v728 = vadd.f32 %v633, %v727
          %729 = vmatmul.f32.gmra.mxu0 %v666
          %v730 = vpop.f32.mrf.mxu0
          %v731 = vadd.f32 %v633, %v730
          %732 = vmatmul.f32.gmra.mxu0 %v669
          %v733 = vpop.f32.mrf.mxu0
          %v734 = vadd.f32 %v633, %v733
          %735 = vmatmul.f32.gmra.mxu0 %v672
          %v736 = vpop.f32.mrf.mxu0
          %v737 = vadd.f32 %v633, %v736
          %738 = vmatmul.f32.gmra.mxu0 %v675
          %v739 = vpop.f32.mrf.mxu0
          %v740 = vadd.f32 %v633, %v739
          %741 = vmatmul.f32.gmra.mxu0 %v678
          %v742 = vpop.f32.mrf.mxu0
          %v743 = vadd.f32 %v633, %v742
          %744 = vmatmul.f32.gmra.mxu0 %v681
          %v745 = vpop.f32.mrf.mxu0
          %v746 = vadd.f32 %v633, %v745
          %747 = vdwg.mxu0
          %748 = vst.msk [vmem:[#allocation3] sm:$0xff] %vm477, %v701
          %749 = vst.msk [vmem:[#allocation3 + $0x8] sm:$0xff] %vm477, %v704
          %750 = vst.msk [vmem:[#allocation3 + $0x10] sm:$0xff] %vm477, %v707
          %751 = vst.msk [vmem:[#allocation3 + $0x18] sm:$0xff] %vm477, %v710
          %752 = vst.msk [vmem:[#allocation3 + $0x20] sm:$0xff] %vm477, %v713
          %753 = vst.msk [vmem:[#allocation3 + $0x28] sm:$0xff] %vm477, %v716
          %754 = vst.msk [vmem:[#allocation3 + $0x30] sm:$0xff] %vm477, %v719
          %755 = vst.msk [vmem:[#allocation3 + $0x38] sm:$0xff] %vm477, %v722
          %756 = vst.msk [vmem:[#allocation3 + $0x40] sm:$0xff] %vm477, %v725
          %757 = vst.msk [vmem:[#allocation3 + $0x48] sm:$0xff] %vm477, %v728
          %758 = vst.msk [vmem:[#allocation3 + $0x50] sm:$0xff] %vm477, %v731
          %759 = vst.msk [vmem:[#allocation3 + $0x58] sm:$0xff] %vm477, %v734
          %760 = vst.msk [vmem:[#allocation3 + $0x60] sm:$0xff] %vm477, %v737
          %761 = vst.msk [vmem:[#allocation3 + $0x68] sm:$0xff] %vm477, %v740
          %762 = vst.msk [vmem:[#allocation3 + $0x70] sm:$0xff] %vm477, %v743
          %763 = vst.msk [vmem:[#allocation3 + $0x78] sm:$0xff] %vm477, %v746
        $region60: #{tpu_custom_call.1} parent=55 // pred_fallthru
          _
        %v764 = vld [vmem:[%s422] sm:$0xff]
        %vm765 = vcmp.ne.f32.partialorder %v764, %v764
        %v766 = vsel %vm765, 0.0, %v764
        %vm767 = vcmp.eq.f32.partialorder %v766, inf
        %v768 = vsel %vm767, 1.0, %v766
        %vm769 = vcmp.eq.f32.partialorder %v768, -inf
        %v770 = vsel %vm769, -1.0, %v768
        %v771 = vld [vmem:[%s3] sm:$0xff]
        %v772 = vld [vmem:[%s3 + $0x8] sm:$0xff]
        %v773 = vld [vmem:[%s3 + $0x10] sm:$0xff]
        %v774 = vld [vmem:[%s3 + $0x18] sm:$0xff]
        %v775 = vld [vmem:[%s4] sm:$0x1]
        %v777 = vperm.slane %v775, 0
        %vm779 = vcmask 261120
        %v781 = vsel %vm779, %v770, 0
        %783 = vmatpush.msra.mxu0 0.0
        %784 = vmatpush.msra.mxu0 0.0
        %785 = vmatpush.msra.mxu0 0.0
        %786 = vmatpush.msra.mxu0 0.0
        %787 = vmatpush.msra.mxu0 0.0
        %788 = vmatpush.msra.mxu0 0.0
        %789 = vmatpush.msra.mxu0 0.0
        %790 = vmatpush.msra.mxu0 0.0
        %791 = vmatpush.msra.mxu0 0.0
        %792 = vmatpush.msra.mxu0 0.0
        %793 = vmatpush.msra.mxu0 0.0
        %794 = vmatpush.msra.mxu0 0.0
        %795 = vmatpush.msra.mxu0 %v774
        %796 = vmatpush.msra.mxu0 %v773
        %797 = vmatpush.msra.mxu0 %v772
        %798 = vmatpush.msra.mxu0 %v771
        %799 = vmatmul.f32.gmra.mxu0 %v781
        %v800 = vpop.f32.mrf.mxu0
        %v801 = vadd.f32 %v777, %v800
        %802 = vdwg.mxu0
        %v803 = vmul.f32 %v801, 0.17677669
        %v804 = vld [vmem:[#allocation2] sm:$0xff]
        %v805 = vld [vmem:[#allocation2 + $0x8] sm:$0xff]
        %v806 = vld [vmem:[#allocation2 + $0x10] sm:$0xff]
        %v807 = vld [vmem:[#allocation2 + $0x18] sm:$0xff]
        %v809 = vsel %vm779, %v803, 0
        %811 = vmatpush.msra.mxu0 0.0
        %812 = vmatpush.msra.mxu0 0.0
        %813 = vmatpush.msra.mxu0 0.0
        %814 = vmatpush.msra.mxu0 0.0
        %815 = vmatpush.msra.mxu0 0.0
        %816 = vmatpush.msra.mxu0 0.0
        %817 = vmatpush.msra.mxu0 0.0
        %818 = vmatpush.msra.mxu0 0.0
        %819 = vmatpush.msra.mxu0 0.0
        %820 = vmatpush.msra.mxu0 0.0
        %821 = vmatpush.msra.mxu0 0.0
        %822 = vmatpush.msra.mxu0 0.0
        %823 = vmatpush.msra.mxu0 %v807
        %824 = vmatpush.msra.mxu0 %v806
        %825 = vmatpush.msra.mxu0 %v805
        %826 = vmatpush.msra.mxu0 %v804
        %827 = vmatmul.f32.gmra.mxu0 %v809
        %v828 = vpop.f32.mrf.mxu0
        %v829 = vadd.f32 0.0, %v828
        %830 = vdwg.mxu0
        %v831 = vlaneseq
        %v832 = vand.u32 %v831, 127
        %vm833 = vcmp.lt.s32.totalorder %v832, 8
        %v834 = vsel %vm833, 1, 0
        %vm835 = vcmp.eq.s32.totalorder %v834, 1
        %v836 = vsel %vm835, %v829, -inf
        %837 = vmax.xlane.f32.xlu0 %v836
        %v838 = vpop.xlane.xlu0 %837
        %v839 = vsub.f32 %v836, %v838
        %v840 = vmul.f32 %v839, 1.442695
        %v841 = vpow.pop %v840
        %842 = vadd.xlane.f32.xlu0 %v841
        %v843 = vpop.xlane.xlu0 %842
        %v844 = vrcp.pop %v843
        %v845 = vmul.f32 %v843, %v844
        %v846 = vsub.f32 2.0, %v845
        %v847 = vmul.f32 %v844, %v846
        %v848 = vmul.f32 %v841, %v847
        %v849 = vld [vmem:[#allocation3] sm:$0xff]
        %v850 = vld [vmem:[#allocation3 + $0x8] sm:$0xff]
        %v851 = vld [vmem:[#allocation3 + $0x10] sm:$0xff]
        %v852 = vld [vmem:[#allocation3 + $0x18] sm:$0xff]
        %v853 = vld [vmem:[#allocation3 + $0x20] sm:$0xff]
        %v854 = vld [vmem:[#allocation3 + $0x28] sm:$0xff]
        %v855 = vld [vmem:[#allocation3 + $0x30] sm:$0xff]
        %v856 = vld [vmem:[#allocation3 + $0x38] sm:$0xff]
        %v857 = vld [vmem:[#allocation3 + $0x40] sm:$0xff]
        %v858 = vld [vmem:[#allocation3 + $0x48] sm:$0xff]
        %v859 = vld [vmem:[#allocation3 + $0x50] sm:$0xff]
        %v860 = vld [vmem:[#allocation3 + $0x58] sm:$0xff]
        %v861 = vld [vmem:[#allocation3 + $0x60] sm:$0xff]
        %v862 = vld [vmem:[#allocation3 + $0x68] sm:$0xff]
        %v863 = vld [vmem:[#allocation3 + $0x70] sm:$0xff]
        %v864 = vld [vmem:[#allocation3 + $0x78] sm:$0xff]
        %865 = vmatpush.msra.mxu0 %v864
        %866 = vmatpush.msra.mxu0 %v863
        %867 = vmatpush.msra.mxu0 %v862
        %868 = vmatpush.msra.mxu0 %v861
        %869 = vmatpush.msra.mxu0 %v860
        %870 = vmatpush.msra.mxu0 %v859
        %871 = vmatpush.msra.mxu0 %v858
        %872 = vmatpush.msra.mxu0 %v857
        %873 = vmatpush.msra.mxu0 %v856
        %874 = vmatpush.msra.mxu0 %v855
        %875 = vmatpush.msra.mxu0 %v854
        %876 = vmatpush.msra.mxu0 %v853
        %877 = vmatpush.msra.mxu0 %v852
        %878 = vmatpush.msra.mxu0 %v851
        %879 = vmatpush.msra.mxu0 %v850
        %880 = vmatpush.msra.mxu0 %v849
        %881 = vmatmul.f32.gmra.mxu0 %v848
        %v882 = vpop.f32.mrf.mxu0
        %v883 = vadd.f32 0.0, %v882
        %884 = vdwg.mxu0
        %885 = vst.msk [vmem:[%s408] sm:$0xff] %vm779, %v883
        %886 = vst [vmem:[%s415] sm:$0xff] %v848
        %s887 = sand.u32 %s256, 1
        %s888 = scalar_lea.sflag [#allocation5], %s887
        %s889 = sand.u32 %s256, 1
        %s890 = smul.addr %s889, 8
        %s891 = scalar_lea.vmem [#allocation4], %s890
        %s892 = sand.u32 %s284, 1
        %s893 = scalar_lea.sflag [#allocation7], %s892
        %s894 = sand.u32 %s284, 1
        %s895 = smul.addr %s894, 8
        %s896 = scalar_lea.vmem [#allocation6], %s895
        // Predicated region
        $region61: #{tpu_custom_call.1} parent=55 // pred_check
          %p897 = pneg %p266
        $region62: #{tpu_custom_call.1} parent=55 // pred_check_branch
          %899 = sbr.rel (%p897) target = $region64
        $region63: #{tpu_custom_call.1} parent=55 // pred_region
          %901 = vsyncadd %s888, 0
          %s902 = sadd.s32 %s33, %s32
          %s903 = smul.addr %s902, 8
          %s904 = scalar_lea.hbm %s9, %s903
          %s906 = sshll.u32 %s891, 4
          %s907 = int_to_ptr.vmem [resolvable:$true] %s906
          %s908 = sshll.u32 %s904, 4
          %s909 = int_to_ptr.hbm [resolvable:$true] %s908
          %911 = dma.vmem_to_hbm [thread:$0]  %s907, 128, %s909, %s888
        $region64: #{tpu_custom_call.1} parent=55 // pred_fallthru
          _
        // Predicated region
        $region65: #{tpu_custom_call.1} parent=55 // pred_check
          %p912 = pneg %p294
        $region66: #{tpu_custom_call.1} parent=55 // pred_check_branch
          %914 = sbr.rel (%p912) target = $region68
        $region67: #{tpu_custom_call.1} parent=55 // pred_region
          %916 = vsyncadd %s893, 0
          %s917 = sadd.s32 %s33, %s32
          %s918 = smul.addr %s917, 8
          %s919 = scalar_lea.hbm %s10, %s918
          %s921 = sshll.u32 %s896, 4
          %s922 = int_to_ptr.vmem [resolvable:$true] %s921
          %s923 = sshll.u32 %s919, 4
          %s924 = int_to_ptr.hbm [resolvable:$true] %s923
          %926 = dma.vmem_to_hbm [thread:$0]  %s922, 128, %s924, %s893
        $region68: #{tpu_custom_call.1} parent=55 // pred_fallthru
          _
      $region56: #{tpu_custom_call.1} parent=5 // pred_fallthru
        _
      %p927 = scmp.le.s32.totalorder 2, %s23
      // Predicated region
      $region69: #{tpu_custom_call.1} parent=5 // pred_check
        %p928 = pneg %p927
      $region70: #{tpu_custom_call.1} parent=5 // pred_check_branch
        %930 = sbr.rel (%p928) target = $region72
      $region71: #{tpu_custom_call.1} parent=5 // pred_region
        %s931 = ssub.s32 %s23, 2
        // Predicated region
        $region73: #{tpu_custom_call.1} parent=71 // pred_check
          %p932 = pneg %p272
        $region74: #{tpu_custom_call.1} parent=71 // pred_check_branch
          %934 = sbr.rel (%p932) target = $region76
        $region75: #{tpu_custom_call.1} parent=71 // pred_region
          %s935 = sand.u32 %s257, 1
          %s936 = scalar_lea.sflag [#allocation5], %s935
          %s937 = sand.u32 %s257, 1
          %s938 = smul.addr %s937, 8
          %s939 = scalar_lea.vmem [#allocation4], %s938
          %941 = dma.done %s936, 128
        $region76: #{tpu_custom_call.1} parent=71 // pred_fallthru
          _
        // Predicated region
        $region77: #{tpu_custom_call.1} parent=71 // pred_check
          %p942 = pneg %p300
        $region78: #{tpu_custom_call.1} parent=71 // pred_check_branch
          %944 = sbr.rel (%p942) target = $region80
        $region79: #{tpu_custom_call.1} parent=71 // pred_region
          %s945 = sand.u32 %s285, 1
          %s946 = scalar_lea.sflag [#allocation7], %s945
          %s947 = sand.u32 %s285, 1
          %s948 = smul.addr %s947, 8
          %s949 = scalar_lea.vmem [#allocation6], %s948
          %951 = dma.done %s946, 128
        $region80: #{tpu_custom_call.1} parent=71 // pred_fallthru
          _
      $region72: #{tpu_custom_call.1} parent=5 // pred_fallthru
        _
    $region6: #{tpu_custom_call.1} parent=1 // loop_footer
      %s27 = sadd.s32 1, %s23
    $region7: #{tpu_custom_call.1} parent=1 // loop_footer_branch
      %22 = sbr.rel target = $region3
    $region8: #{tpu_custom_call.1} parent=1 // loop_exit
      _
    %952 = vsyncpa [#allocation5], 1
    %s953 = scalar_lea.sflag [#allocation5], 1
    %954 = vsyncpa %s953, 1
    %955 = vsyncpa [#allocation7], 1
    %s956 = scalar_lea.sflag [#allocation7], 1
    %957 = vsyncpa %s956, 1

</llo_original>
